<compile_context>
chip_gen: v7x
topology: tpu7x:2x2x1
jax: 0.10.0
libtpu: 0.0.40
codegen_flags: <defaults>
</compile_context>

<pallas_src>
import jax
import jax.numpy as jnp
from jax.experimental import pallas as pl
from jax.experimental.pallas import tpu as pltpu

_LANES = 128


def _cdiv(a: int, b: int) -> int:
    return -(-a // b)


def _round_up(x: int, m: int) -> int:
    return _cdiv(x, m) * m


def _to_lane_slab(x, rows: int):
    """Flatten a *small* tensor to a zero-padded lane-dense (rows, 128) slab.

    Only used for the stop-token arrays (O(B*T) elements) -- the pad copy is
    negligible there, unlike for the mel tensors."""
    flat = x.reshape(-1)
    pad = rows * _LANES - flat.shape[0]
    if pad:
        flat = jnp.pad(flat, (0, pad))
    return flat.reshape(rows, _LANES)


def _device_kind() -> str:
    try:
        return jax.devices()[0].device_kind.lower()
    except Exception:  # pragma: no cover - CPU/interpret fallback
        return ""


def _default_n_par() -> int:
    # v7x has 2 TensorCores sharing the chip's HBM bandwidth: a single TC
    # cannot saturate it for a streaming reduction, so split the row loop.
    # v5e / v6e are single-TC; a core axis there is pure overhead.
    return 2 if "v7" in _device_kind() else 1


def _default_vmem_input_budget() -> int:
    # Budget for the 3 double-buffered mel input blocks; kept under the
    # *default* scoped VMEM limit so no vmem_limit override is required:
    #   v5e: 16 MiB default  -> ~10 MiB of input blocks
    #   v6e / v7x: 32 MiB default -> ~20 MiB of input blocks
    return (10 << 20) if "v5" in _device_kind() else (20 << 20)


def _make_kernel(total_rows: int, tm: int, d: int, steps: int, n_stp_valid: int):
    """total_rows = B*T (valid mel rows); n_stp_valid = B*T stop elements."""

    def kernel(mel_out_ref, mel_post_ref, mel_grnd_ref,
               stp_out_ref, stp_grnd_ref,
               mel_sum_ref, stp_sum_ref, acc_ref):
        c = pl.program_id(0)        # parallel (core-split) axis
        i = pl.program_id(1)        # arbitrary (reduction) axis

        @pl.when(i == 0)
        def _init():
            acc_ref[...] = jnp.zeros_like(acc_ref)

        # ---- mel MSE partial sums: pure elementwise VPU work per step ----
        g = mel_grnd_ref[...].astype(jnp.float32)
        d1 = mel_out_ref[...].astype(jnp.float32) - g
        d2 = mel_post_ref[...].astype(jnp.float32) - g
        sq = d1 * d1 + d2 * d2                      # (tm, d)

        # Unclamped global block index -> number of valid rows in this block.
        # (The index_map clamps the DMA to the last in-bounds block, so any
        #  rows past `rem` are garbage and MUST be masked, never counted.)
        block_idx = c * steps + i
        rem = total_rows - block_idx * tm           # may be <=0 or >= tm

        @pl.when(rem >= tm)
        def _full_block():
            # tile-aligned fold onto a single (8, d) accumulator vreg row
            acc_ref[...] += jnp.sum(sq.reshape(tm // 8, 8, d), axis=0)

        @pl.when(rem < tm)
        def _tail_block():
            ridx = jax.lax.broadcasted_iota(jnp.int32, (tm, d), 0)
            sqm = jnp.where(ridx < rem, sq, 0.0)
            acc_ref[...] += jnp.sum(sqm.reshape(tm // 8, 8, d), axis=0)

        @pl.when(i == pl.num_programs(1) - 1)
        def _finalize():
            # single (tiny) cross-lane reduction per core
            mel_sum_ref[0, 0] = jnp.sum(acc_ref[...])

            @pl.when(c == 0)
            def _bce():
                # stop-token BCE-with-logits (torch-stable form), masked padding
                x = stp_out_ref[...].astype(jnp.float32)
                z = stp_grnd_ref[...].astype(jnp.float32)
                bce = (jnp.maximum(x, 0.0) - x * z
                       + jnp.log1p(jnp.exp(-jnp.abs(x))))
                r, l = x.shape
                flat_idx = (jax.lax.broadcasted_iota(jnp.int32, (r, l), 0) * l
                            + jax.lax.broadcasted_iota(jnp.int32, (r, l), 1))
                bce = jnp.where(flat_idx < n_stp_valid, bce, 0.0)
                stp_sum_ref[0, 0] = jnp.sum(bce)

            @pl.when(c != 0)
            def _zero():
                stp_sum_ref[0, 0] = 0.0

    return kernel


def transformer_tts_loss(pred_outputs, grnd_targets, *,
                         tile_rows: int = 8192,
                         n_par: int | None = None,
                         vmem_input_budget: int | None = None):
    """pred_outputs = (mel_out, mel_out_post, stp_out)
       grnd_targets = (mel_lens, mel_grnd, stp_grnd)
       returns (tot_loss, mel_loss, stp_loss) as float32 scalars."""
    mel_out, mel_out_post, stp_out = pred_outputs
    mel_lens, mel_grnd, stp_grnd = grnd_targets   # mel_lens intentionally unused
    del mel_lens

    B, T, D = mel_out.shape
    n_mel = B * T * D
    n_stp = B * T
    rows = B * T

    if n_par is None:
        n_par = _default_n_par()
    if vmem_input_budget is None:
        vmem_input_budget = _default_vmem_input_budget()

    # ---- mel tiling: (B*T, D) rows, tile (tm, D), split over n_par cores ----
    itemsize = jnp.dtype(mel_out.dtype).itemsize
    per_core_rows = _round_up(_cdiv(rows, n_par), 8)
    # 3 mel inputs x 2 pipeline buffers per block
    tm_budget = max(8, vmem_input_budget // (3 * 2 * D * itemsize))
    tm = min(tile_rows, tm_budget, per_core_rows)
    tm = (tm // 16) * 16 if tm >= 16 else 8       # bf16-friendly sublane packing
    tm = max(tm, 8)

    steps = _cdiv(rows, tm * n_par)               # reduction steps per core
    nblocks_valid = _cdiv(rows, tm)               # last block index with data

    # Free reshapes: no HBM copies of the big mel tensors.
    mel_out_r = mel_out.reshape(rows, D)
    mel_post_r = mel_out_post.reshape(rows, D)
    mel_grnd_r = mel_grnd.reshape(rows, D)

    # ---- stop tokens: small resident lane-dense slab (pad is negligible) ----
    rows_stp = _round_up(_cdiv(n_stp, _LANES), 8)
    stp_out_r = _to_lane_slab(stp_out, rows_stp)
    stp_grnd_r = _to_lane_slab(stp_grnd, rows_stp)

    def mel_spec():
        # Clamp so the DMA never starts past the end of the array; the kernel
        # masks duplicated / partial tail blocks via the unclamped index.
        return pl.BlockSpec(
            (tm, D),
            lambda c, i: (jnp.minimum(c * steps + i, nblocks_valid - 1), 0))

    def stp_spec():
        return pl.BlockSpec((rows_stp, _LANES), lambda c, i: (0, 0))

    def out_spec():
        return pl.BlockSpec((1, 1), lambda c, i: (c, 0),
                            memory_space=pltpu.MemorySpace.SMEM)

    mel_parts, stp_parts = pl.pallas_call(
        _make_kernel(rows, tm, D, steps, n_stp),
        out_shape=(jax.ShapeDtypeStruct((n_par, 1), jnp.float32),
                   jax.ShapeDtypeStruct((n_par, 1), jnp.float32)),
        grid_spec=pltpu.PrefetchScalarGridSpec(
            num_scalar_prefetch=0,
            grid=(n_par, steps),
            in_specs=[mel_spec(), mel_spec(), mel_spec(),
                      stp_spec(), stp_spec()],
            out_specs=(out_spec(), out_spec()),
            scratch_shapes=[pltpu.VMEM((8, D), jnp.float32)]),
        compiler_params=pltpu.CompilerParams(
            dimension_semantics=("parallel", "arbitrary")),
    )(mel_out_r, mel_post_r, mel_grnd_r, stp_out_r, stp_grnd_r)

    mel_loss = jnp.sum(mel_parts) / float(n_mel)
    stp_loss = jnp.sum(stp_parts) / float(n_stp)
    tot_loss = mel_loss + stp_loss
    return tot_loss, mel_loss, stp_loss


def _reference(pred_outputs, grnd_targets):
    mel_out, mel_out_post, stp_out = pred_outputs
    _, mel_grnd, stp_grnd = grnd_targets
    mel_loss = (jnp.mean((mel_out - mel_grnd) ** 2)
                + jnp.mean((mel_out_post - mel_grnd) ** 2))
    x, z = stp_out, stp_grnd
    stp_loss = jnp.mean(jnp.maximum(x, 0.0) - x * z
                        + jnp.log1p(jnp.exp(-jnp.abs(x))))
    return mel_loss + stp_loss, mel_loss, stp_loss


if __name__ == "__main__":
    # Small shapes consistent with the module: batch=2, mel_len=8, mel_dim=32.
    B, T, D = 2, 8, 32
    key = jax.random.PRNGKey(0)
    k1, k2, k3, k4, k5 = jax.random.split(key, 5)

    mel_out      = jax.random.normal(k1, (B, T, D), dtype=jnp.float32)
    mel_out_post = jax.random.normal(k2, (B, T, D), dtype=jnp.float32)
    stp_out      = jax.random.normal(k3, (B, T), dtype=jnp.float32)      # logits
    mel_grnd     = jax.random.normal(k4, (B, T, D), dtype=jnp.float32)
    stp_grnd     = (jax.random.uniform(k5, (B, T)) > 0.8).astype(jnp.float32)
    mel_lens     = jnp.array([T, T - 2], dtype=jnp.int32)

    pred_outputs = (mel_out, mel_out_post, stp_out)
    grnd_targets = (mel_lens, mel_grnd, stp_grnd)

    tot, mel, stp = transformer_tts_loss(pred_outputs, grnd_targets)
    jax.block_until_ready((tot, mel, stp))

    # sanity check against a pure-JAX reference
    rtot, rmel, rstp = _reference(pred_outputs, grnd_targets)
    assert jnp.allclose(tot, rtot, rtol=1e-5, atol=1e-5)
    assert jnp.allclose(mel, rmel, rtol=1e-5, atol=1e-5)
    assert jnp.allclose(stp, rstp, rtol=1e-5, atol=1e-5)

    print("KERNEL_OK")
</pallas_src>

<mosaic_0001>
module attributes {stable_mosaic.version = 11 : i64} {
  func.func @kernel(%arg0: i32, %arg1: i32, %arg2: memref<16x32xf32, #tpu.memory_space<vmem>>, %arg3: memref<16x32xf32, #tpu.memory_space<vmem>>, %arg4: memref<16x32xf32, #tpu.memory_space<vmem>>, %arg5: memref<8x128xf32, #tpu.memory_space<vmem>>, %arg6: memref<8x128xf32, #tpu.memory_space<vmem>>, %arg7: memref<1x1xf32, #tpu.memory_space<smem>>, %arg8: memref<1x1xf32, #tpu.memory_space<smem>>, %arg9: memref<8x32xf32, #tpu.memory_space<vmem>>) attributes {dimension_semantics = [#tpu.dimension_semantics<parallel>, #tpu.dimension_semantics<arbitrary>], iteration_bounds = array<i64: 1, 1>, scalar_prefetch = 0 : i64, scratch_operands = 1 : i64, tpu.core_type = #tpu.core_type<tc>, window_params = [{transform_indices = @transform_0, window_bounds = array<i64: 16, 32>}, {transform_indices = @transform_1, window_bounds = array<i64: 16, 32>}, {transform_indices = @transform_2, window_bounds = array<i64: 16, 32>}, {pipeline_mode = #tpu.pipeline_mode<synchronous>, transform_indices = @transform_3, window_bounds = array<i64: 8, 128>}, {pipeline_mode = #tpu.pipeline_mode<synchronous>, transform_indices = @transform_4, window_bounds = array<i64: 8, 128>}, {transform_indices = @transform_5, window_bounds = array<i64: 1, 1>}, {transform_indices = @transform_6, window_bounds = array<i64: 1, 1>}]} {
    %c0_i32 = arith.constant 0 : i32
    %0 = arith.cmpi eq, %arg1, %c0_i32 : i32
    %1 = arith.extui %0 : i1 to i32
    %c0_i32_0 = arith.constant 0 : i32
    %2 = arith.cmpi ne, %1, %c0_i32_0 : i32
    scf.if %2 {
      %cst = arith.constant 0.000000e+00 : f32
      %24 = vector.broadcast %cst : f32 to vector<8x32xf32>
      %c0_13 = arith.constant 0 : index
      %c0_14 = arith.constant 0 : index
      %25 = vector.load %arg9[%c0_13, %c0_14] : memref<8x32xf32, #tpu.memory_space<vmem>>, vector<8x32xf32>
      tpu.vector_store %arg9[%c0_13, %c0_14], %24 {strides = array<i32>} : memref<8x32xf32, #tpu.memory_space<vmem>>, vector<8x32xf32>,
    } else {
    }
    %c0 = arith.constant 0 : index
    %c0_1 = arith.constant 0 : index
    %3 = vector.load %arg4[%c0, %c0_1] : memref<16x32xf32, #tpu.memory_space<vmem>>, vector<16x32xf32>
    %c0_2 = arith.constant 0 : index
    %c0_3 = arith.constant 0 : index
    %4 = vector.load %arg2[%c0_2, %c0_3] : memref<16x32xf32, #tpu.memory_space<vmem>>, vector<16x32xf32>
    %5 = arith.subf %4, %3 : vector<16x32xf32>
    %c0_4 = arith.constant 0 : index
    %c0_5 = arith.constant 0 : index
    %6 = vector.load %arg3[%c0_4, %c0_5] : memref<16x32xf32, #tpu.memory_space<vmem>>, vector<16x32xf32>
    %7 = arith.subf %6, %3 : vector<16x32xf32>
    %8 = arith.mulf %5, %5 : vector<16x32xf32>
    %9 = arith.mulf %7, %7 : vector<16x32xf32>
    %10 = arith.addf %8, %9 : vector<16x32xf32>
    %c1_i32 = arith.constant 1 : i32
    %11 = arith.muli %arg0, %c1_i32 : i32
    %12 = arith.addi %11, %arg1 : i32
    %c16_i32 = arith.constant 16 : i32
    %13 = arith.muli %12, %c16_i32 : i32
    %c16_i32_6 = arith.constant 16 : i32
    %14 = arith.subi %c16_i32_6, %13 : i32
    %c16_i32_7 = arith.constant 16 : i32
    %15 = arith.cmpi sge, %14, %c16_i32_7 : i32
    %16 = arith.extui %15 : i1 to i32
    %c0_i32_8 = arith.constant 0 : i32
    %17 = arith.cmpi ne, %16, %c0_i32_8 : i32
    scf.if %17 {
      %c0_13 = arith.constant 0 : index
      %c0_14 = arith.constant 0 : index
      %24 = vector.load %arg9[%c0_13, %c0_14] : memref<8x32xf32, #tpu.memory_space<vmem>>, vector<8x32xf32>
      %25 = vector.shape_cast %10 : vector<16x32xf32> to vector<2x8x32xf32>
      %cst = arith.constant dense<0.000000e+00> : vector<8x32xf32>
      %26 = vector.multi_reduction <add>, %25, %cst [0] : vector<2x8x32xf32> to vector<8x32xf32>
      %27 = arith.addf %24, %26 : vector<8x32xf32>
      %c0_15 = arith.constant 0 : index
      %c0_16 = arith.constant 0 : index
      %28 = vector.load %arg9[%c0_15, %c0_16] : memref<8x32xf32, #tpu.memory_space<vmem>>, vector<8x32xf32>
      tpu.vector_store %arg9[%c0_15, %c0_16], %27 {strides = array<i32>} : memref<8x32xf32, #tpu.memory_space<vmem>>, vector<8x32xf32>,
    } else {
    }
    %c16_i32_9 = arith.constant 16 : i32
    %18 = arith.cmpi slt, %14, %c16_i32_9 : i32
    %19 = arith.extui %18 : i1 to i32
    %c0_i32_10 = arith.constant 0 : i32
    %20 = arith.cmpi ne, %19, %c0_i32_10 : i32
    scf.if %20 {
      %24 = tpu.iota {dimensions = array<i32: 0>} : vector<16x32xi32>
      %25 = vector.broadcast %14 : i32 to vector<16x32xi32>
      %26 = arith.cmpi slt, %24, %25 : vector<16x32xi32>
      %cst = arith.constant 0.000000e+00 : f32
      %27 = vector.broadcast %cst : f32 to vector<16x32xf32>
      %28 = arith.select %26, %10, %27 : vector<16x32xi1>, vector<16x32xf32>
      %c0_13 = arith.constant 0 : index
      %c0_14 = arith.constant 0 : index
      %29 = vector.load %arg9[%c0_13, %c0_14] : memref<8x32xf32, #tpu.memory_space<vmem>>, vector<8x32xf32>
      %30 = vector.shape_cast %28 : vector<16x32xf32> to vector<2x8x32xf32>
      %cst_15 = arith.constant dense<0.000000e+00> : vector<8x32xf32>
      %31 = vector.multi_reduction <add>, %30, %cst_15 [0] : vector<2x8x32xf32> to vector<8x32xf32>
      %32 = arith.addf %29, %31 : vector<8x32xf32>
      %c0_16 = arith.constant 0 : index
      %c0_17 = arith.constant 0 : index
      %33 = vector.load %arg9[%c0_16, %c0_17] : memref<8x32xf32, #tpu.memory_space<vmem>>, vector<8x32xf32>
      tpu.vector_store %arg9[%c0_16, %c0_17], %32 {strides = array<i32>} : memref<8x32xf32, #tpu.memory_space<vmem>>, vector<8x32xf32>,
    } else {
    }
    %c0_i32_11 = arith.constant 0 : i32
    %21 = arith.cmpi eq, %arg1, %c0_i32_11 : i32
    %22 = arith.extui %21 : i1 to i32
    %c0_i32_12 = arith.constant 0 : i32
    %23 = arith.cmpi ne, %22, %c0_i32_12 : i32
    scf.if %23 {
      %c0_13 = arith.constant 0 : index
      %c0_14 = arith.constant 0 : index
      %24 = vector.load %arg9[%c0_13, %c0_14] : memref<8x32xf32, #tpu.memory_space<vmem>>, vector<8x32xf32>
      %25 = vector.shape_cast %24 : vector<8x32xf32> to vector<1x8x32xf32>
      %cst = arith.constant dense<0.000000e+00> : vector<1xf32>
      %26 = vector.multi_reduction <add>, %25, %cst [1, 2] : vector<1x8x32xf32> to vector<1xf32>
      %27 = vector.shape_cast %26 : vector<1xf32> to vector<1x1x1xf32>
      %28 = vector.extract %27[0, 0, 0] : f32 from vector<1x1x1xf32>
      %c0_15 = arith.constant 0 : index
      %c0_16 = arith.constant 0 : index
      %29 = memref.load %arg7[%c0_15, %c0_16] : memref<1x1xf32, #tpu.memory_space<smem>>
      memref.store %28, %arg7[%c0_15, %c0_16] : memref<1x1xf32, #tpu.memory_space<smem>>
      %c0_i32_17 = arith.constant 0 : i32
      %30 = arith.cmpi eq, %arg0, %c0_i32_17 : i32
      %31 = arith.extui %30 : i1 to i32
      %c0_i32_18 = arith.constant 0 : i32
      %32 = arith.cmpi ne, %31, %c0_i32_18 : i32
      scf.if %32 {
        %c0_21 = arith.constant 0 : index
        %c0_22 = arith.constant 0 : index
        %36 = vector.load %arg5[%c0_21, %c0_22] : memref<8x128xf32, #tpu.memory_space<vmem>>, vector<8x128xf32>
        %c0_23 = arith.constant 0 : index
        %c0_24 = arith.constant 0 : index
        %37 = vector.load %arg6[%c0_23, %c0_24] : memref<8x128xf32, #tpu.memory_space<vmem>>, vector<8x128xf32>
        %cst_25 = arith.constant 0.000000e+00 : f32
        %38 = vector.broadcast %cst_25 : f32 to vector<8x128xf32>
        %39 = arith.maximumf %36, %38 : vector<8x128xf32>
        %40 = arith.mulf %36, %37 : vector<8x128xf32>
        %41 = arith.subf %39, %40 : vector<8x128xf32>
        %42 = math.absf %36 : vector<8x128xf32>
        %cst_26 = arith.constant 0.000000e+00 : f32
        %43 = vector.broadcast %cst_26 : f32 to vector<8x128xf32>
        %44 = arith.subf %43, %42 : vector<8x128xf32>
        %45 = math.exp %44 : vector<8x128xf32>
        %46 = math.log1p %45 : vector<8x128xf32>
        %47 = arith.addf %41, %46 : vector<8x128xf32>
        %48 = tpu.iota {dimensions = array<i32: 0>} : vector<8x128xi32>
        %c128_i32 = arith.constant 128 : i32
        %49 = vector.broadcast %c128_i32 : i32 to vector<8x128xi32>
        %50 = arith.muli %48, %49 : vector<8x128xi32>
        %51 = tpu.iota {dimensions = array<i32: 1>} : vector<8x128xi32>
        %52 = arith.addi %50, %51 : vector<8x128xi32>
        %c16_i32_27 = arith.constant 16 : i32
        %53 = vector.broadcast %c16_i32_27 : i32 to vector<8x128xi32>
        %54 = arith.cmpi slt, %52, %53 : vector<8x128xi32>
        %cst_28 = arith.constant 0.000000e+00 : f32
        %55 = vector.broadcast %cst_28 : f32 to vector<8x128xf32>
        %56 = arith.select %54, %47, %55 : vector<8x128xi1>, vector<8x128xf32>
        %57 = vector.shape_cast %56 : vector<8x128xf32> to vector<1x8x128xf32>
        %cst_29 = arith.constant dense<0.000000e+00> : vector<1xf32>
        %58 = vector.multi_reduction <add>, %57, %cst_29 [1, 2] : vector<1x8x128xf32> to vector<1xf32>
        %59 = vector.shape_cast %58 : vector<1xf32> to vector<1x1x1xf32>
        %60 = vector.extract %59[0, 0, 0] : f32 from vector<1x1x1xf32>
        %c0_30 = arith.constant 0 : index
        %c0_31 = arith.constant 0 : index
        %61 = memref.load %arg8[%c0_30, %c0_31] : memref<1x1xf32, #tpu.memory_space<smem>>
        memref.store %60, %arg8[%c0_30, %c0_31] : memref<1x1xf32, #tpu.memory_space<smem>>
      } else {
      }
      %c0_i32_19 = arith.constant 0 : i32
      %33 = arith.cmpi ne, %arg0, %c0_i32_19 : i32
      %34 = arith.extui %33 : i1 to i32
      %c0_i32_20 = arith.constant 0 : i32
      %35 = arith.cmpi ne, %34, %c0_i32_20 : i32
      scf.if %35 {
        %cst_21 = arith.constant 0.000000e+00 : f32
        %c0_22 = arith.constant 0 : index
        %c0_23 = arith.constant 0 : index
        %36 = memref.load %arg8[%c0_22, %c0_23] : memref<1x1xf32, #tpu.memory_space<smem>>
        memref.store %cst_21, %arg8[%c0_22, %c0_23] : memref<1x1xf32, #tpu.memory_space<smem>>
      } else {
      }
    } else {
    }
    return
  }
  func.func @transform_0(%arg0: i32, %arg1: i32) -> (i32, i32) {
    %c1_i32 = arith.constant 1 : i32
    %0 = arith.muli %arg0, %c1_i32 : i32
    %1 = arith.addi %0, %arg1 : i32
    %c0_i32 = arith.constant 0 : i32
    %2 = arith.minsi %1, %c0_i32 : i32
    %c0_i32_0 = arith.constant 0 : i32
    %c0_i32_1 = arith.constant 0 : i32
    return %2, %c0_i32_0 : i32, i32
  }
  func.func @transform_1(%arg0: i32, %arg1: i32) -> (i32, i32) {
    %c1_i32 = arith.constant 1 : i32
    %0 = arith.muli %arg0, %c1_i32 : i32
    %1 = arith.addi %0, %arg1 : i32
    %c0_i32 = arith.constant 0 : i32
    %2 = arith.minsi %1, %c0_i32 : i32
    %c0_i32_0 = arith.constant 0 : i32
    %c0_i32_1 = arith.constant 0 : i32
    return %2, %c0_i32_0 : i32, i32
  }
  func.func @transform_2(%arg0: i32, %arg1: i32) -> (i32, i32) {
    %c1_i32 = arith.constant 1 : i32
    %0 = arith.muli %arg0, %c1_i32 : i32
    %1 = arith.addi %0, %arg1 : i32
    %c0_i32 = arith.constant 0 : i32
    %2 = arith.minsi %1, %c0_i32 : i32
    %c0_i32_0 = arith.constant 0 : i32
    %c0_i32_1 = arith.constant 0 : i32
    return %2, %c0_i32_0 : i32, i32
  }
  func.func @transform_3(%arg0: i32, %arg1: i32) -> (i32, i32) {
    %c0_i32 = arith.constant 0 : i32
    %c0_i32_0 = arith.constant 0 : i32
    %c0_i32_1 = arith.constant 0 : i32
    return %c0_i32, %c0_i32_0 : i32, i32
  }
  func.func @transform_4(%arg0: i32, %arg1: i32) -> (i32, i32) {
    %c0_i32 = arith.constant 0 : i32
    %c0_i32_0 = arith.constant 0 : i32
    %c0_i32_1 = arith.constant 0 : i32
    return %c0_i32, %c0_i32_0 : i32, i32
  }
  func.func @transform_5(%arg0: i32, %arg1: i32) -> (i32, i32) {
    %c0_i32 = arith.constant 0 : i32
    %c0_i32_0 = arith.constant 0 : i32
    return %arg0, %c0_i32 : i32, i32
  }
  func.func @transform_6(%arg0: i32, %arg1: i32) -> (i32, i32) {
    %c0_i32 = arith.constant 0 : i32
    %c0_i32_0 = arith.constant 0 : i32
    return %arg0, %c0_i32 : i32, i32
  }
}

</mosaic_0001>

<llo_original>
// kernel: tpu_custom_call.1
$region0: #{tpu_custom_call.1}
  #allocation0 [shape = 'u32[]', space=smem, size = 0x4, offset = 0x4, fixed_abs, tag = 'smem constant byte address 0x4 - core index']
  #allocation1 [shape = 'u32[144,128]{1,0:T(1,128)}', space=vmem, size = 0x12000, scoped, tag = 'internal scratch']
  #allocation2 [shape = 'f32[8,32]{1,0:T(8,128)}', space=vmem, size = 0x1000, scoped, tag = 'scratch operand']
  %s0 = inlined_call_operand.hbm [shape: f32[16,32], index: 0, kind: input, shape index: {}]
  %s1 = inlined_call_operand.hbm [shape: f32[16,32], index: 1, kind: input, shape index: {}]
  %s2 = inlined_call_operand.hbm [shape: f32[16,32], index: 2, kind: input, shape index: {}]
  %s3 = inlined_call_operand.vmem [shape: f32[8,128], index: 3, kind: input, shape index: {}]
  %s4 = inlined_call_operand.hbm [shape: f32[8,128], index: 4, kind: input, shape index: {}]
  %s5 = inlined_call_operand.hbm [shape: f32[1,1], index: 5, kind: output, shape index: {0}]
  %s6 = inlined_call_operand.hbm [shape: f32[1,1], index: 6, kind: output, shape index: {1}]
  %7 = xla_tuple %s5, %s6
  %s8 = sld [smem:[#allocation0]]
  $region78: #{tpu_custom_call.1} parent=0
    _
  %s10 = ssub.s32 1, %s8
  %s11 = scalar_select 0, %s10, %s8
  $region1: #{tpu_custom_call.1} parent=0
    #allocation3 [shape = 'u8[8192]{0}', space=vmem, size = 0x2000, scoped, tag = 'input window, operand 0, single buffered']
    #allocation4 [shape = 's32[1]{0}', space=sflag, size = 0x4, scoped, tag = 'scoped memory for tpu_custom_call.1']
    #allocation5 [shape = 's32[1]{0}', space=sflag, size = 0x4, scoped, tag = 'scoped memory for tpu_custom_call.1']
    #allocation6 [shape = 'u8[8192]{0}', space=vmem, size = 0x2000, scoped, tag = 'input window, operand 1, single buffered']
    #allocation7 [shape = 's32[1]{0}', space=sflag, size = 0x4, scoped, tag = 'scoped memory for tpu_custom_call.1']
    #allocation8 [shape = 'u8[8192]{0}', space=vmem, size = 0x2000, scoped, tag = 'input window, operand 2, single buffered']
    #allocation9 [shape = 'u8[4096]{0}', space=vmem, size = 0x1000, scoped, tag = 'input window, operand 4, single buffered']
    #allocation10 [shape = 's32[1]{0}', space=sflag, size = 0x4, scoped, tag = 'scoped memory for tpu_custom_call.1']
    #allocation11 [shape = 'u8[512]{0}', space=smem, size = 0x200, scoped, tag = 'output window, operand 0, single buffered']
    #allocation12 [shape = 'u8[512]{0}', space=smem, size = 0x200, scoped, tag = 'output window, operand 1, single buffered']
    #allocation13 [shape = 's32[1]{0}', space=sflag, size = 0x4, scoped, tag = 'scoped memory for tpu_custom_call.1']
    %12 = vsyncpa [#allocation4], 0
    %13 = vsyncpa [#allocation7], 0
    %14 = vsyncpa [#allocation10], 0
    %15 = vsyncpa [#allocation5], 0
    %16 = vsyncpa [#allocation13], 0
    // Predicated region
    $region2: #{tpu_custom_call.1} parent=1 // pred_check
      _
    $region3: #{tpu_custom_call.1} parent=1 // pred_check_branch
      %18 = sbr.rel (0) target = $region5
    $region4: #{tpu_custom_call.1} parent=1 // pred_region
      %s19 = sadd.s32 0, 0
      %p20 = scmp.lt.s32.totalorder %s19, 0
      %s21 = scalar_select %p20, %s19, 0
      %s22 = smul.u32 2, %s21
      %s24 = ssub.s32 256, 256
      %25 = vsyncadd [#allocation4], %s24
      %s26 = smul.addr %s22, 128
      %s27 = scalar_lea.hbm %s0, %s26
      %s28 = sshll.u32 [#allocation3], 4
      %s29 = int_to_ptr.vmem [resolvable:$true] %s28
      %34 = dma.hbm_to_vmem [thread:$0]  %s27, 256, %s29, [#allocation4], 128, 128, 8
    $region5: #{tpu_custom_call.1} parent=1 // pred_fallthru
      _
    // Predicated region
    $region6: #{tpu_custom_call.1} parent=1 // pred_check
      _
    $region7: #{tpu_custom_call.1} parent=1 // pred_check_branch
      %36 = sbr.rel (0) target = $region9
    $region8: #{tpu_custom_call.1} parent=1 // pred_region
      %s37 = sadd.s32 0, 0
      %p38 = scmp.lt.s32.totalorder %s37, 0
      %s39 = scalar_select %p38, %s37, 0
      %s40 = smul.u32 2, %s39
      %s42 = ssub.s32 256, 256
      %43 = vsyncadd [#allocation7], %s42
      %s44 = smul.addr %s40, 128
      %s45 = scalar_lea.hbm %s1, %s44
      %s46 = sshll.u32 [#allocation6], 4
      %s47 = int_to_ptr.vmem [resolvable:$true] %s46
      %52 = dma.hbm_to_vmem [thread:$0]  %s45, 256, %s47, [#allocation7], 128, 128, 8
    $region9: #{tpu_custom_call.1} parent=1 // pred_fallthru
      _
    // Predicated region
    $region10: #{tpu_custom_call.1} parent=1 // pred_check
      _
    $region11: #{tpu_custom_call.1} parent=1 // pred_check_branch
      %54 = sbr.rel (0) target = $region13
    $region12: #{tpu_custom_call.1} parent=1 // pred_region
      %s55 = sadd.s32 0, 0
      %p56 = scmp.lt.s32.totalorder %s55, 0
      %s57 = scalar_select %p56, %s55, 0
      %s58 = smul.u32 2, %s57
      %s60 = ssub.s32 256, 256
      %61 = vsyncadd [#allocation7], %s60
      %s62 = smul.addr %s58, 128
      %s63 = scalar_lea.hbm %s2, %s62
      %s64 = sshll.u32 [#allocation8], 4
      %s65 = int_to_ptr.vmem [resolvable:$true] %s64
      %70 = dma.hbm_to_vmem [thread:$0]  %s63, 256, %s65, [#allocation7], 128, 128, 8
    $region13: #{tpu_custom_call.1} parent=1 // pred_fallthru
      _
    // Predicated region
    $region14: #{tpu_custom_call.1} parent=1 // pred_check
      _
    $region15: #{tpu_custom_call.1} parent=1 // pred_check_branch
      %72 = sbr.rel (0) target = $region17
    $region16: #{tpu_custom_call.1} parent=1 // pred_region
      _
    $region17: #{tpu_custom_call.1} parent=1 // pred_fallthru
      _
    // Predicated region
    $region18: #{tpu_custom_call.1} parent=1 // pred_check
      _
    $region19: #{tpu_custom_call.1} parent=1 // pred_check_branch
      %74 = sbr.rel (0) target = $region21
    $region20: #{tpu_custom_call.1} parent=1 // pred_region
      %s76 = ssub.s32 128, 128
      %77 = vsyncadd [#allocation10], %s76
      %s79 = sshll.u32 [#allocation9], 4
      %s80 = int_to_ptr.vmem [resolvable:$true] %s79
      %82 = dma.hbm_to_vmem [thread:$0]  %s4, 128, %s80, [#allocation10]
    $region21: #{tpu_custom_call.1} parent=1 // pred_fallthru
      _
    // Predicated region
    $region22: #{tpu_custom_call.1} parent=1 // pred_check
      _
    $region23: #{tpu_custom_call.1} parent=1 // pred_check_branch
      %84 = sbr.rel (0) target = $region25
    $region24: #{tpu_custom_call.1} parent=1 // pred_region
      %85 = dma.done [#allocation4], 256
    $region25: #{tpu_custom_call.1} parent=1 // pred_fallthru
      _
    // Predicated region
    $region26: #{tpu_custom_call.1} parent=1 // pred_check
      _
    $region27: #{tpu_custom_call.1} parent=1 // pred_check_branch
      %87 = sbr.rel (0) target = $region29
    $region28: #{tpu_custom_call.1} parent=1 // pred_region
      %88 = dma.done [#allocation7], 256
    $region29: #{tpu_custom_call.1} parent=1 // pred_fallthru
      _
    // Predicated region
    $region30: #{tpu_custom_call.1} parent=1 // pred_check
      _
    $region31: #{tpu_custom_call.1} parent=1 // pred_check_branch
      %90 = sbr.rel (0) target = $region33
    $region32: #{tpu_custom_call.1} parent=1 // pred_region
      %91 = dma.done [#allocation7], 256
    $region33: #{tpu_custom_call.1} parent=1 // pred_fallthru
      _
    // Predicated region
    $region34: #{tpu_custom_call.1} parent=1 // pred_check
      _
    $region35: #{tpu_custom_call.1} parent=1 // pred_check_branch
      %93 = sbr.rel (0) target = $region37
    $region36: #{tpu_custom_call.1} parent=1 // pred_region
      %94 = dma.done [#allocation10], 128
    $region37: #{tpu_custom_call.1} parent=1 // pred_fallthru
      _
    %s95 = sadd.s32 0, 0
    %p96 = scmp.lt.s32.totalorder %s95, 0
    %s97 = scalar_select %p96, %s95, 0
    %s98 = smul.u32 2, %s97
    %s99 = sadd.s32 0, 0
    %p100 = scmp.lt.s32.totalorder %s99, 0
    %s101 = scalar_select %p100, %s99, 0
    %s102 = smul.u32 2, %s101
    %s103 = sadd.s32 0, 0
    %p104 = scmp.lt.s32.totalorder %s103, 0
    %s105 = scalar_select %p104, %s103, 0
    %s106 = smul.u32 2, %s105
    %p107 = scmp.eq.s32.totalorder 0, 0
    // Predicated region
    $region38: #{tpu_custom_call.1} parent=1 // pred_check
      %p108 = pneg %p107
    $region39: #{tpu_custom_call.1} parent=1 // pred_check_branch
      %110 = sbr.rel (%p108) target = $region41
    $region40: #{tpu_custom_call.1} parent=1 // pred_region
      %vm111 = vcmask 261120
      %112 = vst.msk [vmem:[#allocation2] sm:$0xff] %vm111, 0.0
    $region41: #{tpu_custom_call.1} parent=1 // pred_fallthru
      _
    %v113 = vld [vmem:[#allocation8] sm:$0xff]
    %v114 = vld [vmem:[#allocation8 + $0x8] sm:$0xff]
    %v115 = vld [vmem:[#allocation3] sm:$0xff]
    %v116 = vld [vmem:[#allocation3 + $0x8] sm:$0xff]
    %v117 = vsub.f32 %v115, %v113
    %v118 = vsub.f32 %v116, %v114
    %v119 = vld [vmem:[#allocation6] sm:$0xff]
    %v120 = vld [vmem:[#allocation6 + $0x8] sm:$0xff]
    %v121 = vsub.f32 %v119, %v113
    %v122 = vsub.f32 %v120, %v114
    %v123 = vmul.f32 %v117, %v117
    %v124 = vmul.f32 %v118, %v118
    %v125 = vmul.f32 %v121, %v121
    %v126 = vmul.f32 %v122, %v122
    %v127 = vadd.f32 %v123, %v125
    %v128 = vadd.f32 %v124, %v126
    %s129 = sadd.s32 0, 0
    %s130 = smul.u32 %s129, 16
    %s131 = ssub.s32 16, %s130
    %p132 = scmp.ge.s32.totalorder %s131, 16
    // Predicated region
    $region42: #{tpu_custom_call.1} parent=1 // pred_check
      %p133 = pneg %p132
    $region43: #{tpu_custom_call.1} parent=1 // pred_check_branch
      %135 = sbr.rel (%p133) target = $region45
    $region44: #{tpu_custom_call.1} parent=1 // pred_region
      %v136 = vld [vmem:[#allocation2] sm:$0xff]
      %vm137 = vcmask 261120
      %v138 = vsel %vm137, %v127, 0.0
      %v139 = vsel %vm137, %v128, 0.0
      %v140 = vadd.f32 %v138, %v139
      %v141 = vadd.f32 %v136, %v140
      %142 = vst.msk [vmem:[#allocation2] sm:$0xff] %vm137, %v141
    $region45: #{tpu_custom_call.1} parent=1 // pred_fallthru
      _
    %p143 = scmp.lt.s32.totalorder %s131, 16
    // Predicated region
    $region46: #{tpu_custom_call.1} parent=1 // pred_check
      %p144 = pneg %p143
    $region47: #{tpu_custom_call.1} parent=1 // pred_check_branch
      %146 = sbr.rel (%p144) target = $region49
    $region48: #{tpu_custom_call.1} parent=1 // pred_region
      %v147 = vlaneseq
      %v148 = vshrl.u32 %v147, 7
      %v149 = vadd.s32 %v148, 8
      %v150 = vstv %s131
      %vm151 = vcmp.lt.s32.totalorder %v148, %v150
      %vm152 = vcmp.lt.s32.totalorder %v149, %v150
      %v153 = vsel %vm151, %v127, 0.0
      %v154 = vsel %vm152, %v128, 0.0
      %v155 = vld [vmem:[#allocation2] sm:$0xff]
      %vm156 = vcmask 261120
      %v157 = vsel %vm156, %v153, 0.0
      %v158 = vsel %vm156, %v154, 0.0
      %v159 = vadd.f32 %v157, %v158
      %v160 = vadd.f32 %v155, %v159
      %161 = vst.msk [vmem:[#allocation2] sm:$0xff] %vm156, %v160
    $region49: #{tpu_custom_call.1} parent=1 // pred_fallthru
      _
    // Predicated region
    $region50: #{tpu_custom_call.1} parent=1 // pred_check
      %p162 = pneg %p107
    $region51: #{tpu_custom_call.1} parent=1 // pred_check_branch
      %164 = sbr.rel (%p162) target = $region53
    $region52: #{tpu_custom_call.1} parent=1 // pred_region
      %v165 = vld [vmem:[#allocation2] sm:$0xff]
      %vm166 = vcmask 261120
      %v167 = vsel %vm166, %v165, 0.0
      %168 = vadd.xlane.f32.xlu0 %v167
      %v169 = vpop.xlane.xlu0 %168
      %v170 = vrot.slane %v169, 4
      %v171 = vadd.f32 %v169, %v170
      %v172 = vrot.slane %v171, 2
      %v173 = vadd.f32 %v171, %v172
      %v174 = vrot.slane %v173, 1
      %v175 = vadd.f32 %v173, %v174
      %s176 = vtos %v175
      %s177 = scalar_lea.smem [#allocation11], 0
      %178 = sst [smem:[%s177]] %s176
      %p179 = scmp.eq.s32.totalorder 0, 0
      // Predicated region
      $region54: #{tpu_custom_call.1} parent=52 // pred_check
        %p180 = pneg %p179
      $region55: #{tpu_custom_call.1} parent=52 // pred_check_branch
        %182 = sbr.rel (%p180) target = $region57
      $region56: #{tpu_custom_call.1} parent=52 // pred_region
        %v183 = vld [vmem:[%s3] sm:$0xff]
        %v184 = vld [vmem:[#allocation9] sm:$0xff]
        %v185 = vmax.f32 %v183, 0.0
        %v186 = vmul.f32 %v183, %v184
        %v187 = vsub.f32 %v185, %v186
        %v188 = vand.u32 2147483647, %v183
        %v189 = vsub.f32 0.0, %v188
        %v190 = vmul.f32 %v189, 1.442695
        %v191 = vpow.pop %v190
        %v192 = vadd.f32 %v191, 1.0
        %v193 = vlog2.pop %v192
        %v194 = vmul.f32 %v193, 0.6931472
        %v195 = vmul.f32 -0.5, %v191
        %v196 = vadd.f32 %v195, 1.0
        %v197 = vmul.f32 %v196, %v191
        %v198 = vand.u32 2147483647, %v191
        %vm199 = vcmp.lt.f32.partialorder %v198, 0.0004427343
        %v200 = vsel %vm199, %v197, %v194
        %v201 = vadd.f32 %v187, %v200
        %v202 = vlaneseq
        %v203 = vshrl.u32 %v202, 7
        %v204 = vmul.u32 %v203, 128
        %v205 = vlaneseq
        %v206 = vand.u32 %v205, 127
        %v207 = vadd.s32 %v204, %v206
        %vm208 = vcmp.lt.s32.totalorder %v207, 16
        %v209 = vsel %vm208, %v201, 0.0
        %210 = vadd.xlane.f32.xlu0 %v209
        %v211 = vpop.xlane.xlu0 %210
        %v212 = vrot.slane %v211, 4
        %v213 = vadd.f32 %v211, %v212
        %v214 = vrot.slane %v213, 2
        %v215 = vadd.f32 %v213, %v214
        %v216 = vrot.slane %v215, 1
        %v217 = vadd.f32 %v215, %v216
        %s218 = vtos %v217
        %s219 = scalar_lea.smem [#allocation12], 0
        %220 = sst [smem:[%s219]] %s218
      $region57: #{tpu_custom_call.1} parent=52 // pred_fallthru
        _
      %p221 = scmp.ne.s32.totalorder 0, 0
      // Predicated region
      $region58: #{tpu_custom_call.1} parent=52 // pred_check
        %p222 = pneg %p221
      $region59: #{tpu_custom_call.1} parent=52 // pred_check_branch
        %224 = sbr.rel (%p222) target = $region61
      $region60: #{tpu_custom_call.1} parent=52 // pred_region
        %s225 = scalar_lea.smem [#allocation12], 0
        %226 = sst [smem:[%s225]] 0.0
      $region61: #{tpu_custom_call.1} parent=52 // pred_fallthru
        _
    $region53: #{tpu_custom_call.1} parent=1 // pred_fallthru
      _
    // Predicated region
    $region62: #{tpu_custom_call.1} parent=1 // pred_check
      _
    $region63: #{tpu_custom_call.1} parent=1 // pred_check_branch
      %228 = sbr.rel (0) target = $region65
    $region64: #{tpu_custom_call.1} parent=1 // pred_region
      %s230 = ssub.s32 16, 16
      %231 = vsyncadd [#allocation5], %s230
      %234 = dma.smem_to_hbm [#allocation11], 16, %s5, [#allocation5]
    $region65: #{tpu_custom_call.1} parent=1 // pred_fallthru
      _
    // Predicated region
    $region66: #{tpu_custom_call.1} parent=1 // pred_check
      _
    $region67: #{tpu_custom_call.1} parent=1 // pred_check_branch
      %236 = sbr.rel (0) target = $region69
    $region68: #{tpu_custom_call.1} parent=1 // pred_region
      %s238 = ssub.s32 16, 16
      %239 = vsyncadd [#allocation13], %s238
      %242 = dma.smem_to_hbm [#allocation12], 16, %s6, [#allocation13]
    $region69: #{tpu_custom_call.1} parent=1 // pred_fallthru
      _
    // Predicated region
    $region70: #{tpu_custom_call.1} parent=1 // pred_check
      _
    $region71: #{tpu_custom_call.1} parent=1 // pred_check_branch
      %244 = sbr.rel (0) target = $region73
    $region72: #{tpu_custom_call.1} parent=1 // pred_region
      %245 = dma.done [#allocation5], 16
    $region73: #{tpu_custom_call.1} parent=1 // pred_fallthru
      _
    // Predicated region
    $region74: #{tpu_custom_call.1} parent=1 // pred_check
      _
    $region75: #{tpu_custom_call.1} parent=1 // pred_check_branch
      %247 = sbr.rel (0) target = $region77
    $region76: #{tpu_custom_call.1} parent=1 // pred_region
      %248 = dma.done [#allocation13], 16
    $region77: #{tpu_custom_call.1} parent=1 // pred_fallthru
      _
    %249 = sfence
    %250 = vsyncpa [#allocation4], 1
    %251 = vsyncpa [#allocation7], 1
    %252 = vsyncpa [#allocation10], 1
    %253 = vsyncpa [#allocation5], 1
    %254 = vsyncpa [#allocation13], 1

</llo_original>
